<compile_context>
chip_gen: v6e
topology: v6e:2x2x1
jax: 0.10.0
libtpu: 0.0.40
codegen_flags: <defaults>
</compile_context>

<pallas_src>
import functools

import jax
import jax.numpy as jnp
from jax.experimental import pallas as pl
from jax.experimental.pallas import tpu as pltpu

_SQRT_2_OVER_PI = 0.7978845608028654  # sqrt(2/pi)
_GELU_C = 0.044715
_A = 2.0 * _SQRT_2_OVER_PI            # gelu(x) = x * sigmoid(x*(A + B*x*x))
_B = _A * _GELU_C


def _gelu_kernel(x_ref, o_ref, *, compute_dtype):
    x = x_ref[...].astype(compute_dtype)
    a = jnp.asarray(_A, compute_dtype)
    b = jnp.asarray(_B, compute_dtype)
    z = x * (a + b * (x * x))            # == 2*sqrt(2/pi)*(x + 0.044715*x^3)
    # 0.5*x*(1 + tanh(z/2)) == x * sigmoid(z) == x / (1 + exp(-z))
    o_ref[...] = (x / (1.0 + jnp.exp(-z))).astype(o_ref.dtype)


def _pick_lane_width(total):
    """Largest multiple of 128 (<= 2048) that divides `total`, else None."""
    for c in (2048, 1024, 512, 256, 128):
        if total % c == 0:
            return c
    return None


def _bf16_math_ok():
    """bf16 VPU/EUP exists on v6e and newer; keep f32 math on v5e/older."""
    try:
        kind = jax.devices()[0].device_kind.lower()
    except Exception:
        return False
    return not any(v in kind for v in ("v2", "v3", "v4", "v5"))


def gelu(x, *, target_block_bytes=4 << 20, vmem_limit_bytes=32 << 20):
    """Tanh-approx (GPT-2) GELU, elementwise, for any input shape/dtype."""
    orig_shape = x.shape
    orig_dtype = x.dtype
    total = x.size
    if total == 0:
        return x

    compute_dtype = (jnp.bfloat16
                     if orig_dtype == jnp.bfloat16 and _bf16_math_ok()
                     else jnp.float32)

    # ---- lane-dense 2-D view, no HBM copy on the common path -------------
    flat = x.reshape(-1)
    lane = _pick_lane_width(total)
    pad = 0
    if lane is None:
        # Rare ragged case (x.size not a multiple of 128): minimal tail pad.
        # TODO(synk): replace with an in-kernel masked store driven by a
        # scalar-prefetched `total` to avoid the pad/slice HBM copies.
        lane = 128
        padded = pl.cdiv(total, lane) * lane
        pad = padded - total
        flat = jnp.pad(flat, (0, pad))
    rows = flat.size // lane
    x2d = flat.reshape(rows, lane)

    # ---- row tile: ~4 MiB blocks on an 8-sublane granule ------------------
    csize = jnp.dtype(compute_dtype).itemsize   # bounds f32 temps too, not just IO
    tr = max(8, (target_block_bytes // (lane * csize)) // 8 * 8)
    tr = min(tr, rows)
    if tr >= rows and rows >= 16:
        # Ensure >=2 grid steps so both v7x TensorCores get work.
        tr = pl.cdiv(pl.cdiv(rows, 2), 8) * 8

    grid = (pl.cdiv(rows, tr),)   # ragged last row-block is masked by Pallas

    out2d = pl.pallas_call(
        functools.partial(_gelu_kernel, compute_dtype=compute_dtype),
        out_shape=jax.ShapeDtypeStruct((rows, lane), orig_dtype),
        grid_spec=pltpu.PrefetchScalarGridSpec(
            num_scalar_prefetch=0,
            grid=grid,
            in_specs=[pl.BlockSpec((tr, lane), lambda i: (i, 0))],
            out_specs=pl.BlockSpec((tr, lane), lambda i: (i, 0)),
        ),
        compiler_params=pltpu.CompilerParams(
            dimension_semantics=("parallel",),
            vmem_limit_bytes=vmem_limit_bytes,
        ),
    )(x2d)

    out = out2d.reshape(-1)
    if pad:
        out = out[:total]
    return out.reshape(orig_shape)


if __name__ == "__main__":
    # Small transformer-ish activation: batch=2, seq=8, emb_dim=32.
    B, S, E = 2, 8, 32
    key = jax.random.PRNGKey(0)
    x = jax.random.normal(key, (B, S, E), dtype=jnp.float32)

    out = jax.block_until_ready(gelu(x))

    # Pure-JAX reference of the PyTorch module's forward.
    ref = 0.5 * x * (1.0 + jnp.tanh(jnp.sqrt(2.0 / jnp.pi)
                                    * (x + 0.044715 * x ** 3)))
    assert out.shape == x.shape and out.dtype == x.dtype
    assert jnp.allclose(out, ref, atol=1e-5, rtol=1e-5), "mismatch vs reference"

    print("KERNEL_OK")
</pallas_src>

<mosaic_0001>
module attributes {stable_mosaic.version = 11 : i64} {
  func.func @_gelu_kernel(%arg0: i32, %arg1: memref<1x512xf32, #tpu.memory_space<vmem>>, %arg2: memref<1x512xf32, #tpu.memory_space<vmem>>) attributes {dimension_semantics = [#tpu.dimension_semantics<parallel>], iteration_bounds = array<i64: 1>, scalar_prefetch = 0 : i64, scratch_operands = 0 : i64, tpu.core_type = #tpu.core_type<tc>, window_params = [{transform_indices = @transform_0, window_bounds = array<i64: 1, 512>}, {transform_indices = @transform_1, window_bounds = array<i64: 1, 512>}]} {
    %c0 = arith.constant 0 : index
    %c0_0 = arith.constant 0 : index
    %0 = vector.load %arg1[%c0, %c0_0] : memref<1x512xf32, #tpu.memory_space<vmem>>, vector<1x512xf32>
    %1 = arith.mulf %0, %0 : vector<1x512xf32>
    %cst = arith.constant 0.0713548139 : f32
    %2 = vector.broadcast %cst : f32 to vector<1x512xf32>
    %3 = arith.mulf %2, %1 : vector<1x512xf32>
    %cst_1 = arith.constant 1.59576917 : f32
    %4 = vector.broadcast %cst_1 : f32 to vector<1x512xf32>
    %5 = arith.addf %4, %3 : vector<1x512xf32>
    %6 = arith.mulf %0, %5 : vector<1x512xf32>
    %cst_2 = arith.constant 0.000000e+00 : f32
    %7 = vector.broadcast %cst_2 : f32 to vector<1x512xf32>
    %8 = arith.subf %7, %6 : vector<1x512xf32>
    %9 = math.exp %8 : vector<1x512xf32>
    %cst_3 = arith.constant 1.000000e+00 : f32
    %10 = vector.broadcast %cst_3 : f32 to vector<1x512xf32>
    %11 = arith.addf %10, %9 : vector<1x512xf32>
    %12 = arith.divf %0, %11 : vector<1x512xf32>
    %c0_4 = arith.constant 0 : index
    %c0_5 = arith.constant 0 : index
    %13 = vector.load %arg2[%c0_4, %c0_5] : memref<1x512xf32, #tpu.memory_space<vmem>>, vector<1x512xf32>
    tpu.vector_store %arg2[%c0_4, %c0_5], %12 {strides = array<i32>} : memref<1x512xf32, #tpu.memory_space<vmem>>, vector<1x512xf32>,
    return
  }
  func.func @transform_0(%arg0: i32) -> (i32, i32) {
    %c0_i32 = arith.constant 0 : i32
    %c0_i32_0 = arith.constant 0 : i32
    return %arg0, %c0_i32 : i32, i32
  }
  func.func @transform_1(%arg0: i32) -> (i32, i32) {
    %c0_i32 = arith.constant 0 : i32
    %c0_i32_0 = arith.constant 0 : i32
    return %arg0, %c0_i32 : i32, i32
  }
}

</mosaic_0001>

<llo_original>
// kernel: tpu_custom_call.1
$region0: #{tpu_custom_call.1}
  #allocation0 [shape = 'u32[]', space=smem, size = 0x4, offset = 0x4, fixed_abs, tag = 'smem constant byte address 0x4 - core index']
  #allocation1 [shape = 'u32[144,128]{1,0:T(1,128)}', space=vmem, size = 0x12000, scoped, tag = 'internal scratch']
  %s0 = inlined_call_operand.hbm [shape: f32[1,512], index: 0, kind: input, shape index: {}]
  %s1 = inlined_call_operand.hbm [shape: f32[1,512], index: 1, kind: output, shape index: {}]
  %s2 = sld [smem:[#allocation0]]
  $region18: #{tpu_custom_call.1} parent=0
    _
  %s4 = ssub.s32 1, %s2
  %s5 = scalar_select 0, %s4, %s2
  $region1: #{tpu_custom_call.1} parent=0
    #allocation2 [shape = 'u8[2048]{0}', space=vmem, size = 0x800, scoped, tag = 'input window, operand 0, single buffered']
    #allocation3 [shape = 's32[1]{0}', space=sflag, size = 0x4, scoped, tag = 'scoped memory for tpu_custom_call.1']
    #allocation4 [shape = 's32[1]{0}', space=sflag, size = 0x4, scoped, tag = 'scoped memory for tpu_custom_call.1']
    #allocation5 [shape = 'u8[2048]{0}', space=vmem, size = 0x800, scoped, tag = 'output window, operand 0, single buffered']
    %6 = vsyncpa [#allocation3], 0
    %7 = vsyncpa [#allocation4], 0
    // Predicated region
    $region2: #{tpu_custom_call.1} parent=1 // pred_check
      _
    $region3: #{tpu_custom_call.1} parent=1 // pred_check_branch
      %9 = sbr.rel (0) target = $region5
    $region4: #{tpu_custom_call.1} parent=1 // pred_region
      %s11 = ssub.s32 64, 64
      %12 = vsyncadd [#allocation3], %s11
      %s14 = sshll.u32 [#allocation2], 4
      %s15 = int_to_ptr.vmem [resolvable:$true] %s14
      %17 = dma.hbm_to_vmem [thread:$0]  %s0, 64, %s15, [#allocation3]
    $region5: #{tpu_custom_call.1} parent=1 // pred_fallthru
      _
    // Predicated region
    $region6: #{tpu_custom_call.1} parent=1 // pred_check
      _
    $region7: #{tpu_custom_call.1} parent=1 // pred_check_branch
      %19 = sbr.rel (0) target = $region9
    $region8: #{tpu_custom_call.1} parent=1 // pred_region
      %20 = dma.done [#allocation3], 64
    $region9: #{tpu_custom_call.1} parent=1 // pred_fallthru
      _
    %v21 = vld [vmem:[#allocation2] sm:$0xf]
    %v22 = vmul.f32 %v21, %v21
    %v23 = vmul.f32 %v22, 0.071354814
    %v24 = vadd.f32 %v23, 1.5957692
    %v25 = vmul.f32 %v21, %v24
    %v26 = vsub.f32 0.0, %v25
    %v27 = vmul.f32 %v26, 1.442695
    %v28 = vpow.pop %v27
    %v29 = vadd.f32 %v28, 1.0
    %v30 = vrcp.pop %v29
    %v31 = vmul.f32 %v21, %v30
    %v32 = vlaneseq
    %vm33 = vcmp.ge.s32.totalorder %v32, 0
    %vm34 = vcmp.lt.s32.totalorder %v32, 512
    %vm35 = vmand %vm33, %vm34
    %36 = vst.msk [vmem:[#allocation5] sm:$0xf] %vm35, %v31
    // Predicated region
    $region10: #{tpu_custom_call.1} parent=1 // pred_check
      _
    $region11: #{tpu_custom_call.1} parent=1 // pred_check_branch
      %38 = sbr.rel (0) target = $region13
    $region12: #{tpu_custom_call.1} parent=1 // pred_region
      %s40 = ssub.s32 64, 64
      %41 = vsyncadd [#allocation4], %s40
      %s43 = sshll.u32 [#allocation5], 4
      %s44 = int_to_ptr.vmem [resolvable:$true] %s43
      %46 = dma.vmem_to_hbm [thread:$0]  %s44, 64, %s1, [#allocation4]
    $region13: #{tpu_custom_call.1} parent=1 // pred_fallthru
      _
    // Predicated region
    $region14: #{tpu_custom_call.1} parent=1 // pred_check
      _
    $region15: #{tpu_custom_call.1} parent=1 // pred_check_branch
      %48 = sbr.rel (0) target = $region17
    $region16: #{tpu_custom_call.1} parent=1 // pred_region
      %49 = dma.done [#allocation4], 64
    $region17: #{tpu_custom_call.1} parent=1 // pred_fallthru
      _
    %50 = vsyncpa [#allocation3], 1
    %51 = vsyncpa [#allocation4], 1

</llo_original>
